<compile_context>
chip_gen: v6e
topology: v6e:2x2x1
jax: 0.10.0
libtpu: 0.0.40
codegen_flags: <defaults>
</compile_context>

<pallas_src>
import jax
import jax.numpy as jnp
from jax import lax
from jax.experimental import pallas as pl
from jax.experimental.pallas import tpu as pltpu


def _linear_nobias_kernel(x_ref, w_ref, o_ref):
    # y = x @ W.T : contract x's feature dim (1) with W's in_features dim (1).
    # W arrives in PyTorch nn.Linear layout (out_features, in_features), so no
    # transpose is materialized anywhere; the MXU handles this contraction natively.
    o_ref[...] = lax.dot_general(
        x_ref[...],
        w_ref[...],
        dimension_numbers=(((1,), (1,)), ((), ())),
        preferred_element_type=jnp.float32,
    ).astype(o_ref.dtype)


def _pick_tm(m, b, itemsize):
    """Largest row tile (multiple of 8) s.t. 2x double-buffered (x tile + y tile)
    plus the resident (b, b) weight stay under ~24 MiB of VMEM.  Safe on v7x
    (64 MiB physical / 32 MiB default scoped); ample headroom on v5e/v6e (128 MiB)."""
    budget = 24 * 1024 * 1024
    w_bytes = b * b * itemsize
    rem = max(budget - w_bytes, 4 * 1024 * 1024)
    tm = rem // (4 * b * itemsize)          # 2 buffers each for x-tile and y-tile
    tm = int(max(8, min(tm, 1024)))
    if tm >= m:
        return m                            # single block == full array extent (always legal)
    return max(8, (tm // 8) * 8)            # sublane-aligned for f32


def dynamics_forward(x, weight):
    """y = x @ weight.T  (nn.Linear, bias=False) via a Pallas TPU kernel.

    x:      (..., b)
    weight: (b, b)   -- PyTorch nn.Linear layout (out_features, in_features)
    """
    b_out, b_in = weight.shape
    assert x.shape[-1] == b_in
    lead_shape = x.shape[:-1]
    m = 1
    for d in lead_shape:
        m *= d

    if m == 0:  # empty leading dims: nothing to compute, avoid a zero-size grid
        return jnp.zeros((*lead_shape, b_out), dtype=x.dtype)

    x2d = x.reshape(m, b_in)
    itemsize = jnp.dtype(x.dtype).itemsize
    tm = _pick_tm(m, max(b_in, b_out), itemsize)
    grid_m = pl.cdiv(m, tm)

    cost = pl.CostEstimate(
        flops=2 * m * b_in * b_out,
        transcendentals=0,
        bytes_accessed=(m * b_in + b_in * b_out + m * b_out) * itemsize,
    )

    out2d = pl.pallas_call(
        _linear_nobias_kernel,
        out_shape=jax.ShapeDtypeStruct((m, b_out), x.dtype),
        grid_spec=pltpu.PrefetchScalarGridSpec(
            num_scalar_prefetch=0,
            grid=(grid_m,),
            in_specs=[
                # x tiles stream across the grid; ragged tail handled by Pallas masking.
                pl.BlockSpec((tm, b_in), lambda i: (i, 0)),
                # Weight block index is constant -> stays resident in VMEM for the whole grid.
                pl.BlockSpec((b_out, b_in), lambda i: (0, 0)),
            ],
            out_specs=pl.BlockSpec((tm, b_out), lambda i: (i, 0)),
        ),
        compiler_params=pltpu.CompilerParams(
            # Row tiles are independent (no reduction across the grid) -> parallel.
            dimension_semantics=("parallel",),
            vmem_limit_bytes=64 * 1024 * 1024,
        ),
        cost_estimate=cost,
    )(x2d, weight)

    return out2d.reshape(*lead_shape, b_out)


if __name__ == "__main__":
    key = jax.random.PRNGKey(0)

    # Small shapes consistent with the module: latent dim b applied over (batch, seq, b).
    b = 32
    batch, seq = 2, 8

    x = jax.random.normal(key, (batch, seq, b), dtype=jnp.float32)

    # Deterministic parameter init exactly as in __init__: weight = zeros + 0.001
    weight = jnp.full((b, b), 0.001, dtype=jnp.float32)

    y = dynamics_forward(x, weight)
    y = jax.block_until_ready(y)

    # Reference check against plain JAX (nn.Linear: x @ W.T)
    y_ref = x @ weight.T
    assert y.shape == x.shape
    assert jnp.allclose(y, y_ref, atol=1e-5, rtol=1e-5)

    # Also exercise the tiled (multi-block, ragged-tail) path with a larger m.
    m_big = 1000  # not a multiple of the row tile -> exercises tail masking
    x_big = jax.random.normal(jax.random.PRNGKey(1), (m_big, b), dtype=jnp.float32)
    y_big = jax.block_until_ready(dynamics_forward(x_big, weight))
    assert jnp.allclose(y_big, x_big @ weight.T, atol=1e-5, rtol=1e-5)

    print("KERNEL_OK")
</pallas_src>

<mosaic_0001>
module attributes {stable_mosaic.version = 11 : i64} {
  func.func @_linear_nobias_kernel(%arg0: i32, %arg1: memref<16x32xf32, #tpu.memory_space<vmem>>, %arg2: memref<32x32xf32, #tpu.memory_space<vmem>>, %arg3: memref<16x32xf32, #tpu.memory_space<vmem>>) attributes {dimension_semantics = [#tpu.dimension_semantics<parallel>], iteration_bounds = array<i64: 1>, scalar_prefetch = 0 : i64, scratch_operands = 0 : i64, tpu.core_type = #tpu.core_type<tc>, window_params = [{transform_indices = @transform_0, window_bounds = array<i64: 16, 32>}, {pipeline_mode = #tpu.pipeline_mode<synchronous>, transform_indices = @transform_1, window_bounds = array<i64: 32, 32>}, {transform_indices = @transform_2, window_bounds = array<i64: 16, 32>}]} {
    %c0 = arith.constant 0 : index
    %c0_0 = arith.constant 0 : index
    %0 = vector.load %arg1[%c0, %c0_0] : memref<16x32xf32, #tpu.memory_space<vmem>>, vector<16x32xf32>
    %c0_1 = arith.constant 0 : index
    %c0_2 = arith.constant 0 : index
    %1 = vector.load %arg2[%c0_1, %c0_2] : memref<32x32xf32, #tpu.memory_space<vmem>>, vector<32x32xf32>
    %cst = arith.constant dense<0.000000e+00> : vector<16x32xf32>
    %2 = tpu.matmul %0, %1, %cst {dimension_numbers = #tpu.dot_dimension_numbers<[1], [1], [0], [0], [0, 0, 1, 0], [], []>} : vector<16x32xf32>, vector<32x32xf32>, vector<16x32xf32> -> vector<16x32xf32>
    %c0_3 = arith.constant 0 : index
    %c0_4 = arith.constant 0 : index
    %3 = vector.load %arg3[%c0_3, %c0_4] : memref<16x32xf32, #tpu.memory_space<vmem>>, vector<16x32xf32>
    tpu.vector_store %arg3[%c0_3, %c0_4], %2 {strides = array<i32>} : memref<16x32xf32, #tpu.memory_space<vmem>>, vector<16x32xf32>,
    return
  }
  func.func @transform_0(%arg0: i32) -> (i32, i32) {
    %c0_i32 = arith.constant 0 : i32
    %c0_i32_0 = arith.constant 0 : i32
    return %arg0, %c0_i32 : i32, i32
  }
  func.func @transform_1(%arg0: i32) -> (i32, i32) {
    %c0_i32 = arith.constant 0 : i32
    %c0_i32_0 = arith.constant 0 : i32
    %c0_i32_1 = arith.constant 0 : i32
    return %c0_i32, %c0_i32_0 : i32, i32
  }
  func.func @transform_2(%arg0: i32) -> (i32, i32) {
    %c0_i32 = arith.constant 0 : i32
    %c0_i32_0 = arith.constant 0 : i32
    return %arg0, %c0_i32 : i32, i32
  }
}

</mosaic_0001>

<llo_original>
// kernel: tpu_custom_call.1
$region0: #{tpu_custom_call.1}
  #allocation0 [shape = 'u32[]', space=smem, size = 0x4, offset = 0x4, fixed_abs, tag = 'smem constant byte address 0x4 - core index']
  #allocation1 [shape = 'u32[144,128]{1,0:T(1,128)}', space=vmem, size = 0x12000, scoped, tag = 'internal scratch']
  %s0 = inlined_call_operand.hbm [shape: f32[16,32], index: 0, kind: input, shape index: {}]
  %s1 = inlined_call_operand.hbm [shape: f32[32,32], index: 1, kind: input, shape index: {}]
  %s2 = inlined_call_operand.hbm [shape: f32[16,32], index: 2, kind: output, shape index: {}]
  %s3 = sld [smem:[#allocation0]]
  $region26: #{tpu_custom_call.1} parent=0
    _
  %s5 = ssub.s32 1, %s3
  %s6 = scalar_select 0, %s5, %s3
  $region1: #{tpu_custom_call.1} parent=0
    #allocation2 [shape = 'u8[8192]{0}', space=vmem, size = 0x2000, scoped, tag = 'input window, operand 0, single buffered']
    #allocation3 [shape = 's32[1]{0}', space=sflag, size = 0x4, scoped, tag = 'scoped memory for tpu_custom_call.1']
    #allocation4 [shape = 's32[1]{0}', space=sflag, size = 0x4, scoped, tag = 'scoped memory for tpu_custom_call.1']
    #allocation5 [shape = 'u8[16384]{0}', space=vmem, size = 0x4000, scoped, tag = 'input window, operand 1, single buffered']
    #allocation6 [shape = 's32[1]{0}', space=sflag, size = 0x4, scoped, tag = 'scoped memory for tpu_custom_call.1']
    #allocation7 [shape = 'u8[8192]{0}', space=vmem, size = 0x2000, scoped, tag = 'output window, operand 0, single buffered']
    %7 = vsyncpa [#allocation3], 0
    %8 = vsyncpa [#allocation6], 0
    %9 = vsyncpa [#allocation4], 0
    // Predicated region
    $region2: #{tpu_custom_call.1} parent=1 // pred_check
      _
    $region3: #{tpu_custom_call.1} parent=1 // pred_check_branch
      %11 = sbr.rel (0) target = $region5
    $region4: #{tpu_custom_call.1} parent=1 // pred_region
      %s13 = ssub.s32 256, 256
      %14 = vsyncadd [#allocation3], %s13
      %s15 = sshll.u32 [#allocation2], 4
      %s16 = int_to_ptr.vmem [resolvable:$true] %s15
      %21 = dma.hbm_to_vmem [thread:$0]  %s0, 256, %s16, [#allocation3], 128, 128, 8
    $region5: #{tpu_custom_call.1} parent=1 // pred_fallthru
      _
    // Predicated region
    $region6: #{tpu_custom_call.1} parent=1 // pred_check
      _
    $region7: #{tpu_custom_call.1} parent=1 // pred_check_branch
      %23 = sbr.rel (0) target = $region9
    $region8: #{tpu_custom_call.1} parent=1 // pred_region
      %s25 = ssub.s32 512, 512
      %26 = vsyncadd [#allocation6], %s25
      %s27 = sshll.u32 [#allocation5], 4
      %s28 = int_to_ptr.vmem [resolvable:$true] %s27
      %33 = dma.hbm_to_vmem [thread:$0]  %s1, 512, %s28, [#allocation6], 128, 128, 8
    $region9: #{tpu_custom_call.1} parent=1 // pred_fallthru
      _
    // Predicated region
    $region10: #{tpu_custom_call.1} parent=1 // pred_check
      _
    $region11: #{tpu_custom_call.1} parent=1 // pred_check_branch
      %35 = sbr.rel (0) target = $region13
    $region12: #{tpu_custom_call.1} parent=1 // pred_region
      %36 = dma.done [#allocation3], 256
    $region13: #{tpu_custom_call.1} parent=1 // pred_fallthru
      _
    // Predicated region
    $region14: #{tpu_custom_call.1} parent=1 // pred_check
      _
    $region15: #{tpu_custom_call.1} parent=1 // pred_check_branch
      %38 = sbr.rel (0) target = $region17
    $region16: #{tpu_custom_call.1} parent=1 // pred_region
      %39 = dma.done [#allocation6], 512
    $region17: #{tpu_custom_call.1} parent=1 // pred_fallthru
      _
    %v40 = vld [vmem:[#allocation2] sm:$0xff]
    %v41 = vld [vmem:[#allocation2 + $0x8] sm:$0xff]
    %v42 = vld [vmem:[#allocation5] sm:$0xff]
    %v43 = vld [vmem:[#allocation5 + $0x8] sm:$0xff]
    %v44 = vld [vmem:[#allocation5 + $0x10] sm:$0xff]
    %v45 = vld [vmem:[#allocation5 + $0x18] sm:$0xff]
    %vm46 = vcmask 261120
    %v48 = vsel %vm46, %v40, 0
    %v51 = vsel %vm46, %v41, 0
    %v54 = vsel %vm46, %v42, 0
    %v57 = vsel %vm46, %v43, 0
    %v60 = vsel %vm46, %v44, 0
    %v63 = vsel %vm46, %v45, 0
    %65 = vmatprep.subr.mxu0 0.0
    %66 = vmatpush1.xpose.msra.mxu0 0.0
    %67 = vmatprep.subr.mxu0 0.0
    %68 = vmatpush1.xpose.msra.mxu0 0.0
    %69 = vmatprep.subr.mxu0 0.0
    %70 = vmatpush1.xpose.msra.mxu0 0.0
    %71 = vmatprep.subr.mxu0 0.0
    %72 = vmatpush1.xpose.msra.mxu0 0.0
    %73 = vmatprep.subr.mxu0 0.0
    %74 = vmatpush1.xpose.msra.mxu0 0.0
    %75 = vmatprep.subr.mxu0 0.0
    %76 = vmatpush1.xpose.msra.mxu0 0.0
    %77 = vmatprep.subr.mxu0 0.0
    %78 = vmatpush1.xpose.msra.mxu0 0.0
    %79 = vmatprep.subr.mxu0 0.0
    %80 = vmatpush1.xpose.msra.mxu0 0.0
    %81 = vmatprep.subr.mxu0 0.0
    %82 = vmatpush1.xpose.msra.mxu0 0.0
    %83 = vmatprep.subr.mxu0 0.0
    %84 = vmatpush1.xpose.msra.mxu0 0.0
    %85 = vmatprep.subr.mxu0 0.0
    %86 = vmatpush1.xpose.msra.mxu0 0.0
    %87 = vmatprep.subr.mxu0 0.0
    %88 = vmatpush1.xpose.msra.mxu0 0.0
    %89 = vmatprep.subr.mxu0 0.0
    %90 = vmatpush1.xpose.msra.mxu0 %v63
    %91 = vmatprep.subr.mxu0 0.0
    %92 = vmatpush1.xpose.msra.mxu0 %v60
    %93 = vmatprep.subr.mxu0 0.0
    %94 = vmatpush1.xpose.msra.mxu0 %v57
    %95 = vmatprep.subr.mxu0 0.0
    %96 = vmatpush1.xpose.msra.mxu0 %v54
    %97 = vmatprep.subr.mxu0 0.0
    %98 = vmatpush2.xpose.msra.mxu0 0.0
    %99 = vmatprep.subr.mxu0 0.0
    %100 = vmatpush2.xpose.msra.mxu0 0.0
    %101 = vmatprep.subr.mxu0 0.0
    %102 = vmatpush2.xpose.msra.mxu0 0.0
    %103 = vmatprep.subr.mxu0 0.0
    %104 = vmatpush2.xpose.msra.mxu0 0.0
    %105 = vmatprep.subr.mxu0 0.0
    %106 = vmatpush2.xpose.msra.mxu0 0.0
    %107 = vmatprep.subr.mxu0 0.0
    %108 = vmatpush2.xpose.msra.mxu0 0.0
    %109 = vmatprep.subr.mxu0 0.0
    %110 = vmatpush2.xpose.msra.mxu0 0.0
    %111 = vmatprep.subr.mxu0 0.0
    %112 = vmatpush2.xpose.msra.mxu0 0.0
    %113 = vmatprep.subr.mxu0 0.0
    %114 = vmatpush2.xpose.msra.mxu0 0.0
    %115 = vmatprep.subr.mxu0 0.0
    %116 = vmatpush2.xpose.msra.mxu0 0.0
    %117 = vmatprep.subr.mxu0 0.0
    %118 = vmatpush2.xpose.msra.mxu0 0.0
    %119 = vmatprep.subr.mxu0 0.0
    %120 = vmatpush2.xpose.msra.mxu0 0.0
    %121 = vmatprep.subr.mxu0 0.0
    %122 = vmatpush2.xpose.msra.mxu0 0.0
    %123 = vmatprep.subr.mxu0 0.0
    %124 = vmatpush2.xpose.msra.mxu0 0.0
    %125 = vmatprep.subr.mxu0 0.0
    %126 = vmatpush2.xpose.msra.mxu0 0.0
    %127 = vmatprep.subr.mxu0 0.0
    %128 = vmatpush2.xpose.msra.mxu0 0.0
    %129 = vmatprep.mubr.f32.mxu0 0.0
    %130 = vmatmul.mubr.f32.gmra.mxu0 %v48
    %v131 = vpop.f32.mrf.mxu0
    %v132 = vadd.f32 0.0, %v131
    %v133 = vpop.f32.mrf.mxu0
    %134 = vmatprep.mubr.f32.mxu0 0.0
    %135 = vmatmul.mubr.f32.gmra.mxu0 %v51
    %v136 = vpop.f32.mrf.mxu0
    %v137 = vadd.f32 0.0, %v136
    %v138 = vpop.f32.mrf.mxu0
    %139 = vdwg.mxu0
    %140 = vst.msk [vmem:[#allocation7] sm:$0xff] %vm46, %v132
    %141 = vst.msk [vmem:[#allocation7 + $0x8] sm:$0xff] %vm46, %v137
    // Predicated region
    $region18: #{tpu_custom_call.1} parent=1 // pred_check
      _
    $region19: #{tpu_custom_call.1} parent=1 // pred_check_branch
      %143 = sbr.rel (0) target = $region21
    $region20: #{tpu_custom_call.1} parent=1 // pred_region
      %s145 = ssub.s32 256, 256
      %146 = vsyncadd [#allocation4], %s145
      %s147 = sshll.u32 [#allocation7], 4
      %s148 = int_to_ptr.vmem [resolvable:$true] %s147
      %153 = dma.vmem_to_hbm [thread:$0]  %s148, 256, %s2, [#allocation4], 128, 128, 8
    $region21: #{tpu_custom_call.1} parent=1 // pred_fallthru
      _
    // Predicated region
    $region22: #{tpu_custom_call.1} parent=1 // pred_check
      _
    $region23: #{tpu_custom_call.1} parent=1 // pred_check_branch
      %155 = sbr.rel (0) target = $region25
    $region24: #{tpu_custom_call.1} parent=1 // pred_region
      %156 = dma.done [#allocation4], 256
    $region25: #{tpu_custom_call.1} parent=1 // pred_fallthru
      _
    %157 = vsyncpa [#allocation3], 1
    %158 = vsyncpa [#allocation6], 1
    %159 = vsyncpa [#allocation4], 1

</llo_original>
